<compile_context>
chip_gen: v7x
topology: tpu7x:2x2x1
jax: 0.10.0
libtpu: 0.0.40
codegen_flags: <defaults>
</compile_context>

<pallas_src>
import functools

import jax
import jax.numpy as jnp
from jax.experimental import pallas as pl
from jax.experimental.pallas import tpu as pltpu


def _round_up(x, m):
    return (x + m - 1) // m * m


def _vmem_capacity_bytes():
    """Physical VMEM of the local chip; conservative 64 MiB if the query fails."""
    try:
        return int(pltpu.get_tpu_info().vmem_capacity_bytes)
    except Exception:
        return 64 * 1024 * 1024


def _mlp_fused_kernel(*refs, relu_flags, compute_dtype):
    """Whole MLP for one batch tile; activations never leave VMEM/vregs.

    refs = (x_ref, w0_ref, b0_ref, w1_ref, b1_ref, ..., o_ref)
    """
    x_ref = refs[0]
    o_ref = refs[-1]
    cdt = jnp.dtype(compute_dtype)

    h = x_ref[...]
    for i, relu in enumerate(relu_flags):
        w_ref = refs[1 + 2 * i]
        b_ref = refs[2 + 2 * i]
        if relu:
            # ReLU on the VPU; after the first layer h is f32 (MXU accumulates f32).
            h = jnp.maximum(h, 0.0)
        lhs = h if h.dtype == cdt else h.astype(cdt)
        w = w_ref[...]
        rhs = w if w.dtype == cdt else w.astype(cdt)
        # MXU matmul, f32 accumulation; f32 bias folded straight onto the result.
        # NOTE: if this ever becomes a K-tiled accumulator loop, the bias add must
        # move into the pl.when finalize step (no per-K-step broadcasts).
        h = jnp.dot(lhs, rhs, preferred_element_type=jnp.float32) + b_ref[...]
    o_ref[...] = h.astype(o_ref.dtype)


def mlp_forward_fused(x, weights_pad, biases_pad, relu_flags, out_features,
                      *, compute_dtype=jnp.float32, tm_max=512):
    """x: (B, Din). weights_pad[i]: (din_pad, dout_pad) zero padded (f32 or bf16).
    biases_pad[i]: (1, dout_pad) f32 zero padded. Returns (B, out_features) f32."""
    B, Din = x.shape
    d0_pad = weights_pad[0].shape[0]
    dlast_pad = weights_pad[-1].shape[1]
    d_pads = [d0_pad] + [w.shape[1] for w in weights_pad]

    is_bf16 = jnp.dtype(compute_dtype) == jnp.dtype(jnp.bfloat16)
    act_in_dtype = jnp.bfloat16 if is_bf16 else jnp.float32
    # bf16 packs 16 sublanes per vreg, f32 packs 8 -> keep tiles unmasked/dense.
    sub = 16 if is_bf16 else 8

    b_base = _round_up(max(B, sub), sub)
    # Aim for >= 2 grid steps when the batch allows it so the "parallel" batch
    # axis can be sharded across both TensorCores on v7x.
    if b_base >= 2 * sub:
        tm = min(tm_max, _round_up((b_base + 1) // 2, sub))
    else:
        tm = b_base
    tm = max(sub, _round_up(tm, sub))

    # VMEM budgeting: x/out tiles double-buffered by the pipeline, parameters
    # single-buffered (constant index_map + Buffered(1)), plus ~2 live f32
    # activation tiles at the widest layer.
    x_itemsize = jnp.dtype(act_in_dtype).itemsize
    param_bytes = sum(int(w.size) * w.dtype.itemsize + int(b.size) * b.dtype.itemsize
                      for w, b in zip(weights_pad, biases_pad))
    max_d = max(d_pads)

    def vmem_est(tm_, param_buffers):
        return (2 * tm_ * d0_pad * x_itemsize        # input tile (double buffered)
                + 2 * tm_ * dlast_pad * 4            # output tile (double buffered)
                + param_buffers * param_bytes        # resident parameters
                + 2 * tm_ * max_d * 4)               # live f32 activations / MXU result

    vmem_cap = int(0.85 * _vmem_capacity_bytes())    # leave internal-scratch headroom

    if vmem_est(sub, 1) > vmem_cap:
        # TODO(synk): per-layer (M,N,K)-tiled fallback with an f32 VMEM accumulator
        # + pl.when init/finalize for models whose padded weights don't fit VMEM.
        raise NotImplementedError(
            "padded MLP parameters exceed this chip's VMEM budget; tiled fallback "
            "not implemented")

    while tm > sub and vmem_est(tm, 1) > vmem_cap:
        tm = max(sub, _round_up(tm // 2, sub))

    b_pad = _round_up(b_base, tm)
    grid = (b_pad // tm,)

    # Zero-pad (and cast) the input only when actually needed; padded rows/cols
    # contribute exact zeros through every matmul (only the bias lands on padded
    # rows, and those rows are sliced away below).
    if (B, Din) == (b_pad, d0_pad) and x.dtype == jnp.dtype(act_in_dtype):
        x_pad = x
    else:
        x_pad = jnp.zeros((b_pad, d0_pad), act_in_dtype).at[:B, :Din].set(
            x.astype(act_in_dtype))

    flat_params = []
    for w, b in zip(weights_pad, biases_pad):
        flat_params.extend((w, b))

    # Advisory cost estimate for the XLA scheduler.
    flops = 2 * b_pad * sum(w.shape[0] * w.shape[1] for w in weights_pad)
    bytes_accessed = int(b_pad * d0_pad * x_itemsize + b_pad * dlast_pad * 4
                         + param_bytes)
    cost = pl.CostEstimate(flops=flops, transcendentals=0,
                           bytes_accessed=bytes_accessed)

    kernel = functools.partial(
        _mlp_fused_kernel,
        relu_flags=tuple(bool(r) for r in relu_flags),
        compute_dtype=compute_dtype)

    def build_and_call(single_buffer_params):
        spec_kwargs = {}
        if single_buffer_params:
            # Constant block -> fetched once; no need for the default 2-deep buffer.
            spec_kwargs = dict(pipeline_mode=pl.Buffered(1))

        in_specs = [pl.BlockSpec((tm, d0_pad), lambda i: (i, 0))]
        for w, b in zip(weights_pad, biases_pad):
            in_specs.append(pl.BlockSpec(w.shape, lambda i: (0, 0), **spec_kwargs))
            in_specs.append(pl.BlockSpec((1, b.shape[-1]), lambda i: (0, 0),
                                         **spec_kwargs))
        out_specs = pl.BlockSpec((tm, dlast_pad), lambda i: (i, 0))

        est = vmem_est(tm, 1 if single_buffer_params else 2)
        vmem_limit = None
        if est > 12 * 1024 * 1024:
            vmem_limit = min(vmem_cap, max(int(est * 1.25), 16 * 1024 * 1024))

        return pl.pallas_call(
            kernel,
            out_shape=jax.ShapeDtypeStruct((b_pad, dlast_pad), jnp.float32),
            grid=grid,
            in_specs=in_specs,
            out_specs=out_specs,
            compiler_params=pltpu.CompilerParams(
                dimension_semantics=("parallel",),   # batch tiles -> both TCs
                vmem_limit_bytes=vmem_limit,
            ),
            cost_estimate=cost,
        )(x_pad, *flat_params)

    try:
        out_pad = build_and_call(True)
    except Exception:
        # Fallback for Pallas versions that reject pipeline_mode on pallas_call
        # BlockSpecs: default double-buffered params are correct, just fatter.
        out_pad = build_and_call(False)

    return out_pad[:B, :out_features]


class MLPPallas:
    """JAX/Pallas equivalent of the PyTorch MLP module (single fused kernel)."""

    def __init__(self, layer_sizes, final_relu=False, key=None,
                 compute_dtype=jnp.float32):
        layer_sizes = [int(s) for s in layer_sizes]
        self.layer_sizes = layer_sizes
        self.compute_dtype = compute_dtype
        num_layers = len(layer_sizes) - 1
        final_relu_layer = num_layers if final_relu else num_layers - 1
        self.relu_flags = [i < final_relu_layer for i in range(num_layers)]

        if key is None:
            key = jax.random.PRNGKey(0)

        # Lane-dense padded feature dims (multiples of 128).
        self.padded_sizes = [_round_up(s, 128) for s in layer_sizes]

        # bf16 weight STORAGE on the bf16 compute path: halves weight DMA bytes
        # and VMEM residency; biases stay f32 (added onto the f32 MXU result).
        is_bf16 = jnp.dtype(compute_dtype) == jnp.dtype(jnp.bfloat16)
        param_dtype = jnp.bfloat16 if is_bf16 else jnp.float32

        self.weights = []       # unpadded (din, dout) f32 -- used by the reference
        self.biases = []        # unpadded (dout,) f32
        self.weights_pad = []   # (din_pad, dout_pad) zero padded, param_dtype
        self.biases_pad = []    # (1, dout_pad) zero padded, f32
        for i in range(num_layers):
            din, dout = layer_sizes[i], layer_sizes[i + 1]
            dinp, doutp = self.padded_sizes[i], self.padded_sizes[i + 1]
            key, kw, kb = jax.random.split(key, 3)
            # torch.nn.Linear-style uniform(-1/sqrt(din), 1/sqrt(din)) init,
            # stored as (din, dout) (already transposed vs torch's (dout, din)).
            bound = 1.0 / (float(din) ** 0.5)
            w = jax.random.uniform(kw, (din, dout), jnp.float32, -bound, bound)
            bb = jax.random.uniform(kb, (dout,), jnp.float32, -bound, bound)
            self.weights.append(w)
            self.biases.append(bb)
            self.weights_pad.append(
                jnp.zeros((dinp, doutp), param_dtype).at[:din, :dout].set(
                    w.astype(param_dtype)))
            self.biases_pad.append(
                jnp.zeros((1, doutp), jnp.float32).at[0, :dout].set(bb))

    def __call__(self, x):
        return mlp_forward_fused(
            x, self.weights_pad, self.biases_pad, self.relu_flags,
            self.layer_sizes[-1], compute_dtype=self.compute_dtype)


def mlp_reference(x, weights, biases, relu_flags):
    """Pure-JAX reference of the same forward pass (unpadded f32 weights)."""
    out = x
    for w, b, relu in zip(weights, biases, relu_flags):
        if relu:
            out = jnp.maximum(out, 0.0)
        out = out @ w + b
    return out


if __name__ == "__main__":
    key = jax.random.PRNGKey(0)
    kx, kp = jax.random.split(key)

    # Small shapes consistent with the module: batch=8, layer_sizes=[32, 64, 16]
    batch = 8
    layer_sizes = [32, 64, 16]
    x = jax.random.normal(kx, (batch, layer_sizes[0]), jnp.float32)

    # f32 compute path for exact checking (use compute_dtype=jnp.bfloat16 on
    # v6e/v7x for the halved-DMA bf16 MXU path; relax tolerances accordingly).
    mlp = MLPPallas(layer_sizes, final_relu=False, key=kp,
                    compute_dtype=jnp.float32)

    out = mlp(x)
    out = jax.block_until_ready(out)

    ref = mlp_reference(x, mlp.weights, mlp.biases, mlp.relu_flags)
    assert out.shape == (batch, layer_sizes[-1])
    assert jnp.allclose(out, ref, atol=1e-5, rtol=1e-5), "Pallas MLP mismatch vs reference"

    print("KERNEL_OK")
</pallas_src>

<mosaic_0001>
module attributes {stable_mosaic.version = 11 : i64} {
  func.func @_mlp_fused_kernel(%arg0: i32, %arg1: memref<8x128xf32, #tpu.memory_space<vmem>>, %arg2: memref<128x128xf32, #tpu.memory_space<vmem>>, %arg3: memref<1x128xf32, #tpu.memory_space<vmem>>, %arg4: memref<128x128xf32, #tpu.memory_space<vmem>>, %arg5: memref<1x128xf32, #tpu.memory_space<vmem>>, %arg6: memref<8x128xf32, #tpu.memory_space<vmem>>) attributes {dimension_semantics = [#tpu.dimension_semantics<parallel>], iteration_bounds = array<i64: 1>, scalar_prefetch = 0 : i64, scratch_operands = 0 : i64, tpu.core_type = #tpu.core_type<tc>, window_params = [{transform_indices = @transform_0, window_bounds = array<i64: 8, 128>}, {pipeline_mode = #tpu.pipeline_mode<synchronous>, transform_indices = @transform_1, window_bounds = array<i64: 128, 128>}, {pipeline_mode = #tpu.pipeline_mode<synchronous>, transform_indices = @transform_2, window_bounds = array<i64: 1, 128>}, {pipeline_mode = #tpu.pipeline_mode<synchronous>, transform_indices = @transform_3, window_bounds = array<i64: 128, 128>}, {pipeline_mode = #tpu.pipeline_mode<synchronous>, transform_indices = @transform_4, window_bounds = array<i64: 1, 128>}, {transform_indices = @transform_5, window_bounds = array<i64: 8, 128>}]} {
    %c0 = arith.constant 0 : index
    %c0_0 = arith.constant 0 : index
    %0 = vector.load %arg1[%c0, %c0_0] : memref<8x128xf32, #tpu.memory_space<vmem>>, vector<8x128xf32>
    %cst = arith.constant 0.000000e+00 : f32
    %1 = vector.broadcast %cst : f32 to vector<8x128xf32>
    %2 = arith.maximumf %0, %1 : vector<8x128xf32>
    %c0_1 = arith.constant 0 : index
    %c0_2 = arith.constant 0 : index
    %3 = vector.load %arg2[%c0_1, %c0_2] : memref<128x128xf32, #tpu.memory_space<vmem>>, vector<128x128xf32>
    %cst_3 = arith.constant dense<0.000000e+00> : vector<8x128xf32>
    %4 = tpu.matmul %2, %3, %cst_3 {dimension_numbers = #tpu.dot_dimension_numbers<[1], [0], [0], [1], [0, 0, 1, 1], [], []>} : vector<8x128xf32>, vector<128x128xf32>, vector<8x128xf32> -> vector<8x128xf32>
    %c0_4 = arith.constant 0 : index
    %c0_5 = arith.constant 0 : index
    %5 = vector.load %arg3[%c0_4, %c0_5] : memref<1x128xf32, #tpu.memory_space<vmem>>, vector<1x128xf32>
    %6 = vector.broadcast %5 : vector<1x128xf32> to vector<8x128xf32>
    %7 = arith.addf %4, %6 : vector<8x128xf32>
    %c0_6 = arith.constant 0 : index
    %c0_7 = arith.constant 0 : index
    %8 = vector.load %arg4[%c0_6, %c0_7] : memref<128x128xf32, #tpu.memory_space<vmem>>, vector<128x128xf32>
    %cst_8 = arith.constant dense<0.000000e+00> : vector<8x128xf32>
    %9 = tpu.matmul %7, %8, %cst_8 {dimension_numbers = #tpu.dot_dimension_numbers<[1], [0], [0], [1], [0, 0, 1, 1], [], []>} : vector<8x128xf32>, vector<128x128xf32>, vector<8x128xf32> -> vector<8x128xf32>
    %c0_9 = arith.constant 0 : index
    %c0_10 = arith.constant 0 : index
    %10 = vector.load %arg5[%c0_9, %c0_10] : memref<1x128xf32, #tpu.memory_space<vmem>>, vector<1x128xf32>
    %11 = vector.broadcast %10 : vector<1x128xf32> to vector<8x128xf32>
    %12 = arith.addf %9, %11 : vector<8x128xf32>
    %c0_11 = arith.constant 0 : index
    %c0_12 = arith.constant 0 : index
    %13 = vector.load %arg6[%c0_11, %c0_12] : memref<8x128xf32, #tpu.memory_space<vmem>>, vector<8x128xf32>
    tpu.vector_store %arg6[%c0_11, %c0_12], %12 {strides = array<i32>} : memref<8x128xf32, #tpu.memory_space<vmem>>, vector<8x128xf32>,
    return
  }
  func.func @transform_0(%arg0: i32) -> (i32, i32) {
    %c0_i32 = arith.constant 0 : i32
    %c0_i32_0 = arith.constant 0 : i32
    return %arg0, %c0_i32 : i32, i32
  }
  func.func @transform_1(%arg0: i32) -> (i32, i32) {
    %c0_i32 = arith.constant 0 : i32
    %c0_i32_0 = arith.constant 0 : i32
    %c0_i32_1 = arith.constant 0 : i32
    return %c0_i32, %c0_i32_0 : i32, i32
  }
  func.func @transform_2(%arg0: i32) -> (i32, i32) {
    %c0_i32 = arith.constant 0 : i32
    %c0_i32_0 = arith.constant 0 : i32
    %c0_i32_1 = arith.constant 0 : i32
    return %c0_i32, %c0_i32_0 : i32, i32
  }
  func.func @transform_3(%arg0: i32) -> (i32, i32) {
    %c0_i32 = arith.constant 0 : i32
    %c0_i32_0 = arith.constant 0 : i32
    %c0_i32_1 = arith.constant 0 : i32
    return %c0_i32, %c0_i32_0 : i32, i32
  }
  func.func @transform_4(%arg0: i32) -> (i32, i32) {
    %c0_i32 = arith.constant 0 : i32
    %c0_i32_0 = arith.constant 0 : i32
    %c0_i32_1 = arith.constant 0 : i32
    return %c0_i32, %c0_i32_0 : i32, i32
  }
  func.func @transform_5(%arg0: i32) -> (i32, i32) {
    %c0_i32 = arith.constant 0 : i32
    %c0_i32_0 = arith.constant 0 : i32
    return %arg0, %c0_i32 : i32, i32
  }
}

module attributes {stable_mosaic.version = 11 : i64} {
  func.func @_mlp_fused_kernel(%arg0: i32, %arg1: memref<8x128xf32, #tpu.memory_space<vmem>>, %arg2: memref<128x128xf32, #tpu.memory_space<vmem>>, %arg3: memref<1x128xf32, #tpu.memory_space<vmem>>, %arg4: memref<128x128xf32, #tpu.memory_space<vmem>>, %arg5: memref<1x128xf32, #tpu.memory_space<vmem>>, %arg6: memref<8x128xf32, #tpu.memory_space<vmem>>) attributes {dimension_semantics = [#tpu.dimension_semantics<parallel>], iteration_bounds = array<i64: 1>, scalar_prefetch = 0 : i64, scratch_operands = 0 : i64, tpu.core_type = #tpu.core_type<tc>, window_params = [{transform_indices = @transform_0, window_bounds = array<i64: 8, 128>}, {pipeline_mode = #tpu.pipeline_mode<synchronous>, transform_indices = @transform_1, window_bounds = array<i64: 128, 128>}, {pipeline_mode = #tpu.pipeline_mode<synchronous>, transform_indices = @transform_2, window_bounds = array<i64: 1, 128>}, {pipeline_mode = #tpu.pipeline_mode<synchronous>, transform_indices = @transform_3, window_bounds = array<i64: 128, 128>}, {pipeline_mode = #tpu.pipeline_mode<synchronous>, transform_indices = @transform_4, window_bounds = array<i64: 1, 128>}, {transform_indices = @transform_5, window_bounds = array<i64: 8, 128>}]} {
    %c0 = arith.constant 0 : index
    %c0_0 = arith.constant 0 : index
    %0 = vector.load %arg1[%c0, %c0_0] : memref<8x128xf32, #tpu.memory_space<vmem>>, vector<8x128xf32>
    %cst = arith.constant 0.000000e+00 : f32
    %1 = vector.broadcast %cst : f32 to vector<8x128xf32>
    %2 = arith.maximumf %0, %1 : vector<8x128xf32>
    %c0_1 = arith.constant 0 : index
    %c0_2 = arith.constant 0 : index
    %3 = vector.load %arg2[%c0_1, %c0_2] : memref<128x128xf32, #tpu.memory_space<vmem>>, vector<128x128xf32>
    %cst_3 = arith.constant dense<0.000000e+00> : vector<8x128xf32>
    %4 = tpu.matmul %2, %3, %cst_3 {dimension_numbers = #tpu.dot_dimension_numbers<[1], [0], [0], [1], [0, 0, 1, 1], [], []>} : vector<8x128xf32>, vector<128x128xf32>, vector<8x128xf32> -> vector<8x128xf32>
    %c0_4 = arith.constant 0 : index
    %c0_5 = arith.constant 0 : index
    %5 = vector.load %arg3[%c0_4, %c0_5] : memref<1x128xf32, #tpu.memory_space<vmem>>, vector<1x128xf32>
    %6 = vector.broadcast %5 : vector<1x128xf32> to vector<8x128xf32>
    %7 = arith.addf %4, %6 : vector<8x128xf32>
    %c0_6 = arith.constant 0 : index
    %c0_7 = arith.constant 0 : index
    %8 = vector.load %arg4[%c0_6, %c0_7] : memref<128x128xf32, #tpu.memory_space<vmem>>, vector<128x128xf32>
    %cst_8 = arith.constant dense<0.000000e+00> : vector<8x128xf32>
    %9 = tpu.matmul %7, %8, %cst_8 {dimension_numbers = #tpu.dot_dimension_numbers<[1], [0], [0], [1], [0, 0, 1, 1], [], []>} : vector<8x128xf32>, vector<128x128xf32>, vector<8x128xf32> -> vector<8x128xf32>
    %c0_9 = arith.constant 0 : index
    %c0_10 = arith.constant 0 : index
    %10 = vector.load %arg5[%c0_9, %c0_10] : memref<1x128xf32, #tpu.memory_space<vmem>>, vector<1x128xf32>
    %11 = vector.broadcast %10 : vector<1x128xf32> to vector<8x128xf32>
    %12 = arith.addf %9, %11 : vector<8x128xf32>
    %c0_11 = arith.constant 0 : index
    %c0_12 = arith.constant 0 : index
    %13 = vector.load %arg6[%c0_11, %c0_12] : memref<8x128xf32, #tpu.memory_space<vmem>>, vector<8x128xf32>
    tpu.vector_store %arg6[%c0_11, %c0_12], %12 {strides = array<i32>} : memref<8x128xf32, #tpu.memory_space<vmem>>, vector<8x128xf32>,
    return
  }
  func.func @transform_0(%arg0: i32) -> (i32, i32) {
    %c0_i32 = arith.constant 0 : i32
    %c0_i32_0 = arith.constant 0 : i32
    return %arg0, %c0_i32 : i32, i32
  }
  func.func @transform_1(%arg0: i32) -> (i32, i32) {
    %c0_i32 = arith.constant 0 : i32
    %c0_i32_0 = arith.constant 0 : i32
    %c0_i32_1 = arith.constant 0 : i32
    return %c0_i32, %c0_i32_0 : i32, i32
  }
  func.func @transform_2(%arg0: i32) -> (i32, i32) {
    %c0_i32 = arith.constant 0 : i32
    %c0_i32_0 = arith.constant 0 : i32
    %c0_i32_1 = arith.constant 0 : i32
    return %c0_i32, %c0_i32_0 : i32, i32
  }
  func.func @transform_3(%arg0: i32) -> (i32, i32) {
    %c0_i32 = arith.constant 0 : i32
    %c0_i32_0 = arith.constant 0 : i32
    %c0_i32_1 = arith.constant 0 : i32
    return %c0_i32, %c0_i32_0 : i32, i32
  }
  func.func @transform_4(%arg0: i32) -> (i32, i32) {
    %c0_i32 = arith.constant 0 : i32
    %c0_i32_0 = arith.constant 0 : i32
    %c0_i32_1 = arith.constant 0 : i32
    return %c0_i32, %c0_i32_0 : i32, i32
  }
  func.func @transform_5(%arg0: i32) -> (i32, i32) {
    %c0_i32 = arith.constant 0 : i32
    %c0_i32_0 = arith.constant 0 : i32
    return %arg0, %c0_i32 : i32, i32
  }
}

</mosaic_0001>

<llo_original>
// kernel: tpu_custom_call.1
$region0: #{tpu_custom_call.1}
  #allocation0 [shape = 'u32[]', space=smem, size = 0x4, offset = 0x4, fixed_abs, tag = 'smem constant byte address 0x4 - core index']
  #allocation1 [shape = 'u32[144,128]{1,0:T(1,128)}', space=vmem, size = 0x12000, scoped, tag = 'internal scratch']
  %s0 = inlined_call_operand.hbm [shape: f32[8,128], index: 0, kind: input, shape index: {}]
  %s1 = inlined_call_operand.hbm [shape: f32[128,128], index: 1, kind: input, shape index: {}]
  %s2 = inlined_call_operand.vmem [shape: f32[1,128], index: 2, kind: input, shape index: {}]
  %s3 = inlined_call_operand.hbm [shape: f32[128,128], index: 3, kind: input, shape index: {}]
  %s4 = inlined_call_operand.vmem [shape: f32[1,128], index: 4, kind: input, shape index: {}]
  %s5 = inlined_call_operand.hbm [shape: f32[8,128], index: 5, kind: output, shape index: {}]
  %s6 = sld [smem:[#allocation0]]
  $region42: #{tpu_custom_call.1} parent=0
    _
  %s8 = ssub.s32 1, %s6
  %s9 = scalar_select 0, %s8, %s6
  $region1: #{tpu_custom_call.1} parent=0
    #allocation2 [shape = 'u8[4096]{0}', space=vmem, size = 0x1000, scoped, tag = 'input window, operand 0, single buffered']
    #allocation3 [shape = 's32[1]{0}', space=sflag, size = 0x4, scoped, tag = 'scoped memory for tpu_custom_call.1']
    #allocation4 [shape = 's32[1]{0}', space=sflag, size = 0x4, scoped, tag = 'scoped memory for tpu_custom_call.1']
    #allocation5 [shape = 'u8[65536]{0}', space=vmem, size = 0x10000, scoped, tag = 'input window, operand 1, single buffered']
    #allocation6 [shape = 's32[1]{0}', space=sflag, size = 0x4, scoped, tag = 'scoped memory for tpu_custom_call.1']
    #allocation7 [shape = 'u8[65536]{0}', space=vmem, size = 0x10000, scoped, tag = 'input window, operand 3, single buffered']
    #allocation8 [shape = 'u8[4096]{0}', space=vmem, size = 0x1000, scoped, tag = 'output window, operand 0, single buffered']
    %10 = vsyncpa [#allocation3], 0
    %11 = vsyncpa [#allocation6], 0
    %12 = vsyncpa [#allocation4], 0
    // Predicated region
    $region2: #{tpu_custom_call.1} parent=1 // pred_check
      _
    $region3: #{tpu_custom_call.1} parent=1 // pred_check_branch
      %14 = sbr.rel (0) target = $region5
    $region4: #{tpu_custom_call.1} parent=1 // pred_region
      %s16 = ssub.s32 128, 128
      %17 = vsyncadd [#allocation3], %s16
      %s19 = sshll.u32 [#allocation2], 4
      %s20 = int_to_ptr.vmem [resolvable:$true] %s19
      %22 = dma.hbm_to_vmem [thread:$0]  %s0, 128, %s20, [#allocation3]
    $region5: #{tpu_custom_call.1} parent=1 // pred_fallthru
      _
    // Predicated region
    $region6: #{tpu_custom_call.1} parent=1 // pred_check
      _
    $region7: #{tpu_custom_call.1} parent=1 // pred_check_branch
      %24 = sbr.rel (0) target = $region9
    $region8: #{tpu_custom_call.1} parent=1 // pred_region
      %s26 = ssub.s32 2048, 2048
      %27 = vsyncadd [#allocation6], %s26
      %s28 = sshll.u32 [#allocation5], 4
      %s29 = int_to_ptr.vmem [resolvable:$true] %s28
      %34 = dma.hbm_to_vmem [thread:$0]  %s1, 2048, %s29, [#allocation6], 128, 128, 8
    $region9: #{tpu_custom_call.1} parent=1 // pred_fallthru
      _
    // Predicated region
    $region10: #{tpu_custom_call.1} parent=1 // pred_check
      _
    $region11: #{tpu_custom_call.1} parent=1 // pred_check_branch
      %36 = sbr.rel (0) target = $region13
    $region12: #{tpu_custom_call.1} parent=1 // pred_region
      _
    $region13: #{tpu_custom_call.1} parent=1 // pred_fallthru
      _
    // Predicated region
    $region14: #{tpu_custom_call.1} parent=1 // pred_check
      _
    $region15: #{tpu_custom_call.1} parent=1 // pred_check_branch
      %38 = sbr.rel (0) target = $region17
    $region16: #{tpu_custom_call.1} parent=1 // pred_region
      %s40 = ssub.s32 2048, 2048
      %41 = vsyncadd [#allocation6], %s40
      %s42 = sshll.u32 [#allocation7], 4
      %s43 = int_to_ptr.vmem [resolvable:$true] %s42
      %48 = dma.hbm_to_vmem [thread:$0]  %s3, 2048, %s43, [#allocation6], 128, 128, 8
    $region17: #{tpu_custom_call.1} parent=1 // pred_fallthru
      _
    // Predicated region
    $region18: #{tpu_custom_call.1} parent=1 // pred_check
      _
    $region19: #{tpu_custom_call.1} parent=1 // pred_check_branch
      %50 = sbr.rel (0) target = $region21
    $region20: #{tpu_custom_call.1} parent=1 // pred_region
      _
    $region21: #{tpu_custom_call.1} parent=1 // pred_fallthru
      _
    // Predicated region
    $region22: #{tpu_custom_call.1} parent=1 // pred_check
      _
    $region23: #{tpu_custom_call.1} parent=1 // pred_check_branch
      %52 = sbr.rel (0) target = $region25
    $region24: #{tpu_custom_call.1} parent=1 // pred_region
      %53 = dma.done [#allocation3], 128
    $region25: #{tpu_custom_call.1} parent=1 // pred_fallthru
      _
    // Predicated region
    $region26: #{tpu_custom_call.1} parent=1 // pred_check
      _
    $region27: #{tpu_custom_call.1} parent=1 // pred_check_branch
      %55 = sbr.rel (0) target = $region29
    $region28: #{tpu_custom_call.1} parent=1 // pred_region
      %56 = dma.done [#allocation6], 2048
    $region29: #{tpu_custom_call.1} parent=1 // pred_fallthru
      _
    // Predicated region
    $region30: #{tpu_custom_call.1} parent=1 // pred_check
      _
    $region31: #{tpu_custom_call.1} parent=1 // pred_check_branch
      %58 = sbr.rel (0) target = $region33
    $region32: #{tpu_custom_call.1} parent=1 // pred_region
      %59 = dma.done [#allocation6], 2048
    $region33: #{tpu_custom_call.1} parent=1 // pred_fallthru
      _
    %v60 = vld [vmem:[#allocation2] sm:$0xff]
    %v61 = vmax.f32 %v60, 0.0
    %v62 = vld [vmem:[#allocation5] sm:$0xff]
    %v63 = vld [vmem:[#allocation5 + $0x8] sm:$0xff]
    %v64 = vld [vmem:[#allocation5 + $0x10] sm:$0xff]
    %v65 = vld [vmem:[#allocation5 + $0x18] sm:$0xff]
    %v66 = vld [vmem:[#allocation5 + $0x20] sm:$0xff]
    %v67 = vld [vmem:[#allocation5 + $0x28] sm:$0xff]
    %v68 = vld [vmem:[#allocation5 + $0x30] sm:$0xff]
    %v69 = vld [vmem:[#allocation5 + $0x38] sm:$0xff]
    %v70 = vld [vmem:[#allocation5 + $0x40] sm:$0xff]
    %v71 = vld [vmem:[#allocation5 + $0x48] sm:$0xff]
    %v72 = vld [vmem:[#allocation5 + $0x50] sm:$0xff]
    %v73 = vld [vmem:[#allocation5 + $0x58] sm:$0xff]
    %v74 = vld [vmem:[#allocation5 + $0x60] sm:$0xff]
    %v75 = vld [vmem:[#allocation5 + $0x68] sm:$0xff]
    %v76 = vld [vmem:[#allocation5 + $0x70] sm:$0xff]
    %v77 = vld [vmem:[#allocation5 + $0x78] sm:$0xff]
    %v78 = vld [vmem:[%s2] sm:$0x1]
    %v80 = vlaneseq
    %v81 = vshrl.u32 %v80, 7
    %v82 = vsub.s32 0, %v81
    %v83 = vrot.slane %v78, %v82
    %85 = vmatprep.subr.mxu0 0.0
    %86 = vmatpush1.msra.mxu0 %v62
    %87 = vmatprep.subr.mxu0 0.0
    %88 = vmatpush1.msra.mxu0 %v63
    %89 = vmatprep.subr.mxu0 0.0
    %90 = vmatpush1.msra.mxu0 %v64
    %91 = vmatprep.subr.mxu0 0.0
    %92 = vmatpush1.msra.mxu0 %v65
    %93 = vmatprep.subr.mxu0 0.0
    %94 = vmatpush1.msra.mxu0 %v66
    %95 = vmatprep.subr.mxu0 0.0
    %96 = vmatpush1.msra.mxu0 %v67
    %97 = vmatprep.subr.mxu0 0.0
    %98 = vmatpush1.msra.mxu0 %v68
    %99 = vmatprep.subr.mxu0 0.0
    %100 = vmatpush1.msra.mxu0 %v69
    %101 = vmatprep.subr.mxu0 0.0
    %102 = vmatpush1.msra.mxu0 %v70
    %103 = vmatprep.subr.mxu0 0.0
    %104 = vmatpush1.msra.mxu0 %v71
    %105 = vmatprep.subr.mxu0 0.0
    %106 = vmatpush1.msra.mxu0 %v72
    %107 = vmatprep.subr.mxu0 0.0
    %108 = vmatpush1.msra.mxu0 %v73
    %109 = vmatprep.subr.mxu0 0.0
    %110 = vmatpush1.msra.mxu0 %v74
    %111 = vmatprep.subr.mxu0 0.0
    %112 = vmatpush1.msra.mxu0 %v75
    %113 = vmatprep.subr.mxu0 0.0
    %114 = vmatpush1.msra.mxu0 %v76
    %115 = vmatprep.subr.mxu0 0.0
    %116 = vmatpush1.msra.mxu0 %v77
    %117 = vmatprep.subr.mxu0 0.0
    %118 = vmatpush1.msra.mxu0 0.0
    %119 = vmatprep.subr.mxu0 0.0
    %120 = vmatpush1.msra.mxu0 0.0
    %121 = vmatprep.subr.mxu0 0.0
    %122 = vmatpush1.msra.mxu0 0.0
    %123 = vmatprep.subr.mxu0 0.0
    %124 = vmatpush1.msra.mxu0 0.0
    %125 = vmatprep.subr.mxu0 0.0
    %126 = vmatpush1.msra.mxu0 0.0
    %127 = vmatprep.subr.mxu0 0.0
    %128 = vmatpush1.msra.mxu0 0.0
    %129 = vmatprep.subr.mxu0 0.0
    %130 = vmatpush1.msra.mxu0 0.0
    %131 = vmatprep.subr.mxu0 0.0
    %132 = vmatpush1.msra.mxu0 0.0
    %133 = vmatprep.subr.mxu0 0.0
    %134 = vmatpush1.msra.mxu0 0.0
    %135 = vmatprep.subr.mxu0 0.0
    %136 = vmatpush1.msra.mxu0 0.0
    %137 = vmatprep.subr.mxu0 0.0
    %138 = vmatpush1.msra.mxu0 0.0
    %139 = vmatprep.subr.mxu0 0.0
    %140 = vmatpush1.msra.mxu0 0.0
    %141 = vmatprep.subr.mxu0 0.0
    %142 = vmatpush1.msra.mxu0 0.0
    %143 = vmatprep.subr.mxu0 0.0
    %144 = vmatpush1.msra.mxu0 0.0
    %145 = vmatprep.subr.mxu0 0.0
    %146 = vmatpush1.msra.mxu0 0.0
    %147 = vmatprep.subr.mxu0 0.0
    %148 = vmatpush1.msra.mxu0 0.0
    %149 = vmatprep.mubr.f32.mxu0 0.0
    %150 = vmatmul.mubr.f32.gmra.mrb[0].mxu0 %v61
    %v151 = vpop.f32.mrb[0].mxu0
    %v152 = vadd.f32 %v83, %v151
    %v153 = vpop.f32.mrb[0].mxu0
    %154 = vdwg.mxu0
    %v155 = vld [vmem:[#allocation7] sm:$0xff]
    %v156 = vld [vmem:[#allocation7 + $0x8] sm:$0xff]
    %v157 = vld [vmem:[#allocation7 + $0x10] sm:$0xff]
    %v158 = vld [vmem:[#allocation7 + $0x18] sm:$0xff]
    %v159 = vld [vmem:[#allocation7 + $0x20] sm:$0xff]
    %v160 = vld [vmem:[#allocation7 + $0x28] sm:$0xff]
    %v161 = vld [vmem:[#allocation7 + $0x30] sm:$0xff]
    %v162 = vld [vmem:[#allocation7 + $0x38] sm:$0xff]
    %v163 = vld [vmem:[#allocation7 + $0x40] sm:$0xff]
    %v164 = vld [vmem:[#allocation7 + $0x48] sm:$0xff]
    %v165 = vld [vmem:[#allocation7 + $0x50] sm:$0xff]
    %v166 = vld [vmem:[#allocation7 + $0x58] sm:$0xff]
    %v167 = vld [vmem:[#allocation7 + $0x60] sm:$0xff]
    %v168 = vld [vmem:[#allocation7 + $0x68] sm:$0xff]
    %v169 = vld [vmem:[#allocation7 + $0x70] sm:$0xff]
    %v170 = vld [vmem:[#allocation7 + $0x78] sm:$0xff]
    %v171 = vld [vmem:[%s4] sm:$0x1]
    %v173 = vlaneseq
    %v174 = vshrl.u32 %v173, 7
    %v175 = vsub.s32 0, %v174
    %v176 = vrot.slane %v171, %v175
    %178 = vmatprep.subr.mxu0 0.0
    %179 = vmatpush1.msra.mxu0 %v155
    %180 = vmatprep.subr.mxu0 0.0
    %181 = vmatpush1.msra.mxu0 %v156
    %182 = vmatprep.subr.mxu0 0.0
    %183 = vmatpush1.msra.mxu0 %v157
    %184 = vmatprep.subr.mxu0 0.0
    %185 = vmatpush1.msra.mxu0 %v158
    %186 = vmatprep.subr.mxu0 0.0
    %187 = vmatpush1.msra.mxu0 %v159
    %188 = vmatprep.subr.mxu0 0.0
    %189 = vmatpush1.msra.mxu0 %v160
    %190 = vmatprep.subr.mxu0 0.0
    %191 = vmatpush1.msra.mxu0 %v161
    %192 = vmatprep.subr.mxu0 0.0
    %193 = vmatpush1.msra.mxu0 %v162
    %194 = vmatprep.subr.mxu0 0.0
    %195 = vmatpush1.msra.mxu0 %v163
    %196 = vmatprep.subr.mxu0 0.0
    %197 = vmatpush1.msra.mxu0 %v164
    %198 = vmatprep.subr.mxu0 0.0
    %199 = vmatpush1.msra.mxu0 %v165
    %200 = vmatprep.subr.mxu0 0.0
    %201 = vmatpush1.msra.mxu0 %v166
    %202 = vmatprep.subr.mxu0 0.0
    %203 = vmatpush1.msra.mxu0 %v167
    %204 = vmatprep.subr.mxu0 0.0
    %205 = vmatpush1.msra.mxu0 %v168
    %206 = vmatprep.subr.mxu0 0.0
    %207 = vmatpush1.msra.mxu0 %v169
    %208 = vmatprep.subr.mxu0 0.0
    %209 = vmatpush1.msra.mxu0 %v170
    %210 = vmatprep.subr.mxu0 0.0
    %211 = vmatpush1.msra.mxu0 0.0
    %212 = vmatprep.subr.mxu0 0.0
    %213 = vmatpush1.msra.mxu0 0.0
    %214 = vmatprep.subr.mxu0 0.0
    %215 = vmatpush1.msra.mxu0 0.0
    %216 = vmatprep.subr.mxu0 0.0
    %217 = vmatpush1.msra.mxu0 0.0
    %218 = vmatprep.subr.mxu0 0.0
    %219 = vmatpush1.msra.mxu0 0.0
    %220 = vmatprep.subr.mxu0 0.0
    %221 = vmatpush1.msra.mxu0 0.0
    %222 = vmatprep.subr.mxu0 0.0
    %223 = vmatpush1.msra.mxu0 0.0
    %224 = vmatprep.subr.mxu0 0.0
    %225 = vmatpush1.msra.mxu0 0.0
    %226 = vmatprep.subr.mxu0 0.0
    %227 = vmatpush1.msra.mxu0 0.0
    %228 = vmatprep.subr.mxu0 0.0
    %229 = vmatpush1.msra.mxu0 0.0
    %230 = vmatprep.subr.mxu0 0.0
    %231 = vmatpush1.msra.mxu0 0.0
    %232 = vmatprep.subr.mxu0 0.0
    %233 = vmatpush1.msra.mxu0 0.0
    %234 = vmatprep.subr.mxu0 0.0
    %235 = vmatpush1.msra.mxu0 0.0
    %236 = vmatprep.subr.mxu0 0.0
    %237 = vmatpush1.msra.mxu0 0.0
    %238 = vmatprep.subr.mxu0 0.0
    %239 = vmatpush1.msra.mxu0 0.0
    %240 = vmatprep.subr.mxu0 0.0
    %241 = vmatpush1.msra.mxu0 0.0
    %242 = vmatprep.mubr.f32.mxu0 0.0
    %243 = vmatmul.mubr.f32.gmra.mrb[0].mxu0 %v152
    %v244 = vpop.f32.mrb[0].mxu0
    %v245 = vadd.f32 %v176, %v244
    %v246 = vpop.f32.mrb[0].mxu0
    %247 = vdwg.mxu0
    %248 = vst [vmem:[#allocation8] sm:$0xff] %v245
    // Predicated region
    $region34: #{tpu_custom_call.1} parent=1 // pred_check
      _
    $region35: #{tpu_custom_call.1} parent=1 // pred_check_branch
      %250 = sbr.rel (0) target = $region37
    $region36: #{tpu_custom_call.1} parent=1 // pred_region
      %s252 = ssub.s32 128, 128
      %253 = vsyncadd [#allocation4], %s252
      %s255 = sshll.u32 [#allocation8], 4
      %s256 = int_to_ptr.vmem [resolvable:$true] %s255
      %258 = dma.vmem_to_hbm [thread:$0]  %s256, 128, %s5, [#allocation4]
    $region37: #{tpu_custom_call.1} parent=1 // pred_fallthru
      _
    // Predicated region
    $region38: #{tpu_custom_call.1} parent=1 // pred_check
      _
    $region39: #{tpu_custom_call.1} parent=1 // pred_check_branch
      %260 = sbr.rel (0) target = $region41
    $region40: #{tpu_custom_call.1} parent=1 // pred_region
      %261 = dma.done [#allocation4], 128
    $region41: #{tpu_custom_call.1} parent=1 // pred_fallthru
      _
    %262 = vsyncpa [#allocation3], 1
    %263 = vsyncpa [#allocation6], 1
    %264 = vsyncpa [#allocation4], 1

// kernel: tpu_custom_call.1
$region0: #{tpu_custom_call.1}
  #allocation0 [shape = 'u32[]', space=smem, size = 0x4, offset = 0x4, fixed_abs, tag = 'smem constant byte address 0x4 - core index']
  #allocation1 [shape = 'u32[144,128]{1,0:T(1,128)}', space=vmem, size = 0x12000, scoped, tag = 'internal scratch']
  %s0 = inlined_call_operand.hbm [shape: f32[8,128], index: 0, kind: input, shape index: {}]
  %s1 = inlined_call_operand.hbm [shape: f32[128,128], index: 1, kind: input, shape index: {}]
  %s2 = inlined_call_operand.vmem [shape: f32[1,128], index: 2, kind: input, shape index: {}]
  %s3 = inlined_call_operand.hbm [shape: f32[128,128], index: 3, kind: input, shape index: {}]
  %s4 = inlined_call_operand.vmem [shape: f32[1,128], index: 4, kind: input, shape index: {}]
  %s5 = inlined_call_operand.hbm [shape: f32[8,128], index: 5, kind: output, shape index: {}]
  %s6 = sld [smem:[#allocation0]]
  $region42: #{tpu_custom_call.1} parent=0
    _
  %s8 = ssub.s32 1, %s6
  %s9 = scalar_select 0, %s8, %s6
  $region1: #{tpu_custom_call.1} parent=0
    #allocation2 [shape = 'u8[4096]{0}', space=vmem, size = 0x1000, scoped, tag = 'input window, operand 0, single buffered']
    #allocation3 [shape = 's32[1]{0}', space=sflag, size = 0x4, scoped, tag = 'scoped memory for tpu_custom_call.1']
    #allocation4 [shape = 's32[1]{0}', space=sflag, size = 0x4, scoped, tag = 'scoped memory for tpu_custom_call.1']
    #allocation5 [shape = 'u8[65536]{0}', space=vmem, size = 0x10000, scoped, tag = 'input window, operand 1, single buffered']
    #allocation6 [shape = 's32[1]{0}', space=sflag, size = 0x4, scoped, tag = 'scoped memory for tpu_custom_call.1']
    #allocation7 [shape = 'u8[65536]{0}', space=vmem, size = 0x10000, scoped, tag = 'input window, operand 3, single buffered']
    #allocation8 [shape = 'u8[4096]{0}', space=vmem, size = 0x1000, scoped, tag = 'output window, operand 0, single buffered']
    %10 = vsyncpa [#allocation3], 0
    %11 = vsyncpa [#allocation6], 0
    %12 = vsyncpa [#allocation4], 0
    // Predicated region
    $region2: #{tpu_custom_call.1} parent=1 // pred_check
      _
    $region3: #{tpu_custom_call.1} parent=1 // pred_check_branch
      %14 = sbr.rel (0) target = $region5
    $region4: #{tpu_custom_call.1} parent=1 // pred_region
      %s16 = ssub.s32 128, 128
      %17 = vsyncadd [#allocation3], %s16
      %s19 = sshll.u32 [#allocation2], 4
      %s20 = int_to_ptr.vmem [resolvable:$true] %s19
      %22 = dma.hbm_to_vmem [thread:$0]  %s0, 128, %s20, [#allocation3]
    $region5: #{tpu_custom_call.1} parent=1 // pred_fallthru
      _
    // Predicated region
    $region6: #{tpu_custom_call.1} parent=1 // pred_check
      _
    $region7: #{tpu_custom_call.1} parent=1 // pred_check_branch
      %24 = sbr.rel (0) target = $region9
    $region8: #{tpu_custom_call.1} parent=1 // pred_region
      %s26 = ssub.s32 2048, 2048
      %27 = vsyncadd [#allocation6], %s26
      %s28 = sshll.u32 [#allocation5], 4
      %s29 = int_to_ptr.vmem [resolvable:$true] %s28
      %34 = dma.hbm_to_vmem [thread:$0]  %s1, 2048, %s29, [#allocation6], 128, 128, 8
    $region9: #{tpu_custom_call.1} parent=1 // pred_fallthru
      _
    // Predicated region
    $region10: #{tpu_custom_call.1} parent=1 // pred_check
      _
    $region11: #{tpu_custom_call.1} parent=1 // pred_check_branch
      %36 = sbr.rel (0) target = $region13
    $region12: #{tpu_custom_call.1} parent=1 // pred_region
      _
    $region13: #{tpu_custom_call.1} parent=1 // pred_fallthru
      _
    // Predicated region
    $region14: #{tpu_custom_call.1} parent=1 // pred_check
      _
    $region15: #{tpu_custom_call.1} parent=1 // pred_check_branch
      %38 = sbr.rel (0) target = $region17
    $region16: #{tpu_custom_call.1} parent=1 // pred_region
      %s40 = ssub.s32 2048, 2048
      %41 = vsyncadd [#allocation6], %s40
      %s42 = sshll.u32 [#allocation7], 4
      %s43 = int_to_ptr.vmem [resolvable:$true] %s42
      %48 = dma.hbm_to_vmem [thread:$0]  %s3, 2048, %s43, [#allocation6], 128, 128, 8
    $region17: #{tpu_custom_call.1} parent=1 // pred_fallthru
      _
    // Predicated region
    $region18: #{tpu_custom_call.1} parent=1 // pred_check
      _
    $region19: #{tpu_custom_call.1} parent=1 // pred_check_branch
      %50 = sbr.rel (0) target = $region21
    $region20: #{tpu_custom_call.1} parent=1 // pred_region
      _
    $region21: #{tpu_custom_call.1} parent=1 // pred_fallthru
      _
    // Predicated region
    $region22: #{tpu_custom_call.1} parent=1 // pred_check
      _
    $region23: #{tpu_custom_call.1} parent=1 // pred_check_branch
      %52 = sbr.rel (0) target = $region25
    $region24: #{tpu_custom_call.1} parent=1 // pred_region
      %53 = dma.done [#allocation3], 128
    $region25: #{tpu_custom_call.1} parent=1 // pred_fallthru
      _
    // Predicated region
    $region26: #{tpu_custom_call.1} parent=1 // pred_check
      _
    $region27: #{tpu_custom_call.1} parent=1 // pred_check_branch
      %55 = sbr.rel (0) target = $region29
    $region28: #{tpu_custom_call.1} parent=1 // pred_region
      %56 = dma.done [#allocation6], 2048
    $region29: #{tpu_custom_call.1} parent=1 // pred_fallthru
      _
    // Predicated region
    $region30: #{tpu_custom_call.1} parent=1 // pred_check
      _
    $region31: #{tpu_custom_call.1} parent=1 // pred_check_branch
      %58 = sbr.rel (0) target = $region33
    $region32: #{tpu_custom_call.1} parent=1 // pred_region
      %59 = dma.done [#allocation6], 2048
    $region33: #{tpu_custom_call.1} parent=1 // pred_fallthru
      _
    %v60 = vld [vmem:[#allocation2] sm:$0xff]
    %v61 = vmax.f32 %v60, 0.0
    %v62 = vld [vmem:[#allocation5] sm:$0xff]
    %v63 = vld [vmem:[#allocation5 + $0x8] sm:$0xff]
    %v64 = vld [vmem:[#allocation5 + $0x10] sm:$0xff]
    %v65 = vld [vmem:[#allocation5 + $0x18] sm:$0xff]
    %v66 = vld [vmem:[#allocation5 + $0x20] sm:$0xff]
    %v67 = vld [vmem:[#allocation5 + $0x28] sm:$0xff]
    %v68 = vld [vmem:[#allocation5 + $0x30] sm:$0xff]
    %v69 = vld [vmem:[#allocation5 + $0x38] sm:$0xff]
    %v70 = vld [vmem:[#allocation5 + $0x40] sm:$0xff]
    %v71 = vld [vmem:[#allocation5 + $0x48] sm:$0xff]
    %v72 = vld [vmem:[#allocation5 + $0x50] sm:$0xff]
    %v73 = vld [vmem:[#allocation5 + $0x58] sm:$0xff]
    %v74 = vld [vmem:[#allocation5 + $0x60] sm:$0xff]
    %v75 = vld [vmem:[#allocation5 + $0x68] sm:$0xff]
    %v76 = vld [vmem:[#allocation5 + $0x70] sm:$0xff]
    %v77 = vld [vmem:[#allocation5 + $0x78] sm:$0xff]
    %v78 = vld [vmem:[%s2] sm:$0x1]
    %v80 = vlaneseq
    %v81 = vshrl.u32 %v80, 7
    %v82 = vsub.s32 0, %v81
    %v83 = vrot.slane %v78, %v82
    %85 = vmatprep.subr.mxu0 0.0
    %86 = vmatpush1.msra.mxu0 %v62
    %87 = vmatprep.subr.mxu0 0.0
    %88 = vmatpush1.msra.mxu0 %v63
    %89 = vmatprep.subr.mxu0 0.0
    %90 = vmatpush1.msra.mxu0 %v64
    %91 = vmatprep.subr.mxu0 0.0
    %92 = vmatpush1.msra.mxu0 %v65
    %93 = vmatprep.subr.mxu0 0.0
    %94 = vmatpush1.msra.mxu0 %v66
    %95 = vmatprep.subr.mxu0 0.0
    %96 = vmatpush1.msra.mxu0 %v67
    %97 = vmatprep.subr.mxu0 0.0
    %98 = vmatpush1.msra.mxu0 %v68
    %99 = vmatprep.subr.mxu0 0.0
    %100 = vmatpush1.msra.mxu0 %v69
    %101 = vmatprep.subr.mxu0 0.0
    %102 = vmatpush1.msra.mxu0 %v70
    %103 = vmatprep.subr.mxu0 0.0
    %104 = vmatpush1.msra.mxu0 %v71
    %105 = vmatprep.subr.mxu0 0.0
    %106 = vmatpush1.msra.mxu0 %v72
    %107 = vmatprep.subr.mxu0 0.0
    %108 = vmatpush1.msra.mxu0 %v73
    %109 = vmatprep.subr.mxu0 0.0
    %110 = vmatpush1.msra.mxu0 %v74
    %111 = vmatprep.subr.mxu0 0.0
    %112 = vmatpush1.msra.mxu0 %v75
    %113 = vmatprep.subr.mxu0 0.0
    %114 = vmatpush1.msra.mxu0 %v76
    %115 = vmatprep.subr.mxu0 0.0
    %116 = vmatpush1.msra.mxu0 %v77
    %117 = vmatprep.subr.mxu0 0.0
    %118 = vmatpush1.msra.mxu0 0.0
    %119 = vmatprep.subr.mxu0 0.0
    %120 = vmatpush1.msra.mxu0 0.0
    %121 = vmatprep.subr.mxu0 0.0
    %122 = vmatpush1.msra.mxu0 0.0
    %123 = vmatprep.subr.mxu0 0.0
    %124 = vmatpush1.msra.mxu0 0.0
    %125 = vmatprep.subr.mxu0 0.0
    %126 = vmatpush1.msra.mxu0 0.0
    %127 = vmatprep.subr.mxu0 0.0
    %128 = vmatpush1.msra.mxu0 0.0
    %129 = vmatprep.subr.mxu0 0.0
    %130 = vmatpush1.msra.mxu0 0.0
    %131 = vmatprep.subr.mxu0 0.0
    %132 = vmatpush1.msra.mxu0 0.0
    %133 = vmatprep.subr.mxu0 0.0
    %134 = vmatpush1.msra.mxu0 0.0
    %135 = vmatprep.subr.mxu0 0.0
    %136 = vmatpush1.msra.mxu0 0.0
    %137 = vmatprep.subr.mxu0 0.0
    %138 = vmatpush1.msra.mxu0 0.0
    %139 = vmatprep.subr.mxu0 0.0
    %140 = vmatpush1.msra.mxu0 0.0
    %141 = vmatprep.subr.mxu0 0.0
    %142 = vmatpush1.msra.mxu0 0.0
    %143 = vmatprep.subr.mxu0 0.0
    %144 = vmatpush1.msra.mxu0 0.0
    %145 = vmatprep.subr.mxu0 0.0
    %146 = vmatpush1.msra.mxu0 0.0
    %147 = vmatprep.subr.mxu0 0.0
    %148 = vmatpush1.msra.mxu0 0.0
    %149 = vmatprep.mubr.f32.mxu0 0.0
    %150 = vmatmul.mubr.f32.gmra.mrb[0].mxu0 %v61
    %v151 = vpop.f32.mrb[0].mxu0
    %v152 = vadd.f32 %v83, %v151
    %v153 = vpop.f32.mrb[0].mxu0
    %154 = vdwg.mxu0
    %v155 = vld [vmem:[#allocation7] sm:$0xff]
    %v156 = vld [vmem:[#allocation7 + $0x8] sm:$0xff]
    %v157 = vld [vmem:[#allocation7 + $0x10] sm:$0xff]
    %v158 = vld [vmem:[#allocation7 + $0x18] sm:$0xff]
    %v159 = vld [vmem:[#allocation7 + $0x20] sm:$0xff]
    %v160 = vld [vmem:[#allocation7 + $0x28] sm:$0xff]
    %v161 = vld [vmem:[#allocation7 + $0x30] sm:$0xff]
    %v162 = vld [vmem:[#allocation7 + $0x38] sm:$0xff]
    %v163 = vld [vmem:[#allocation7 + $0x40] sm:$0xff]
    %v164 = vld [vmem:[#allocation7 + $0x48] sm:$0xff]
    %v165 = vld [vmem:[#allocation7 + $0x50] sm:$0xff]
    %v166 = vld [vmem:[#allocation7 + $0x58] sm:$0xff]
    %v167 = vld [vmem:[#allocation7 + $0x60] sm:$0xff]
    %v168 = vld [vmem:[#allocation7 + $0x68] sm:$0xff]
    %v169 = vld [vmem:[#allocation7 + $0x70] sm:$0xff]
    %v170 = vld [vmem:[#allocation7 + $0x78] sm:$0xff]
    %v171 = vld [vmem:[%s4] sm:$0x1]
    %v173 = vlaneseq
    %v174 = vshrl.u32 %v173, 7
    %v175 = vsub.s32 0, %v174
    %v176 = vrot.slane %v171, %v175
    %178 = vmatprep.subr.mxu0 0.0
    %179 = vmatpush1.msra.mxu0 %v155
    %180 = vmatprep.subr.mxu0 0.0
    %181 = vmatpush1.msra.mxu0 %v156
    %182 = vmatprep.subr.mxu0 0.0
    %183 = vmatpush1.msra.mxu0 %v157
    %184 = vmatprep.subr.mxu0 0.0
    %185 = vmatpush1.msra.mxu0 %v158
    %186 = vmatprep.subr.mxu0 0.0
    %187 = vmatpush1.msra.mxu0 %v159
    %188 = vmatprep.subr.mxu0 0.0
    %189 = vmatpush1.msra.mxu0 %v160
    %190 = vmatprep.subr.mxu0 0.0
    %191 = vmatpush1.msra.mxu0 %v161
    %192 = vmatprep.subr.mxu0 0.0
    %193 = vmatpush1.msra.mxu0 %v162
    %194 = vmatprep.subr.mxu0 0.0
    %195 = vmatpush1.msra.mxu0 %v163
    %196 = vmatprep.subr.mxu0 0.0
    %197 = vmatpush1.msra.mxu0 %v164
    %198 = vmatprep.subr.mxu0 0.0
    %199 = vmatpush1.msra.mxu0 %v165
    %200 = vmatprep.subr.mxu0 0.0
    %201 = vmatpush1.msra.mxu0 %v166
    %202 = vmatprep.subr.mxu0 0.0
    %203 = vmatpush1.msra.mxu0 %v167
    %204 = vmatprep.subr.mxu0 0.0
    %205 = vmatpush1.msra.mxu0 %v168
    %206 = vmatprep.subr.mxu0 0.0
    %207 = vmatpush1.msra.mxu0 %v169
    %208 = vmatprep.subr.mxu0 0.0
    %209 = vmatpush1.msra.mxu0 %v170
    %210 = vmatprep.subr.mxu0 0.0
    %211 = vmatpush1.msra.mxu0 0.0
    %212 = vmatprep.subr.mxu0 0.0
    %213 = vmatpush1.msra.mxu0 0.0
    %214 = vmatprep.subr.mxu0 0.0
    %215 = vmatpush1.msra.mxu0 0.0
    %216 = vmatprep.subr.mxu0 0.0
    %217 = vmatpush1.msra.mxu0 0.0
    %218 = vmatprep.subr.mxu0 0.0
    %219 = vmatpush1.msra.mxu0 0.0
    %220 = vmatprep.subr.mxu0 0.0
    %221 = vmatpush1.msra.mxu0 0.0
    %222 = vmatprep.subr.mxu0 0.0
    %223 = vmatpush1.msra.mxu0 0.0
    %224 = vmatprep.subr.mxu0 0.0
    %225 = vmatpush1.msra.mxu0 0.0
    %226 = vmatprep.subr.mxu0 0.0
    %227 = vmatpush1.msra.mxu0 0.0
    %228 = vmatprep.subr.mxu0 0.0
    %229 = vmatpush1.msra.mxu0 0.0
    %230 = vmatprep.subr.mxu0 0.0
    %231 = vmatpush1.msra.mxu0 0.0
    %232 = vmatprep.subr.mxu0 0.0
    %233 = vmatpush1.msra.mxu0 0.0
    %234 = vmatprep.subr.mxu0 0.0
    %235 = vmatpush1.msra.mxu0 0.0
    %236 = vmatprep.subr.mxu0 0.0
    %237 = vmatpush1.msra.mxu0 0.0
    %238 = vmatprep.subr.mxu0 0.0
    %239 = vmatpush1.msra.mxu0 0.0
    %240 = vmatprep.subr.mxu0 0.0
    %241 = vmatpush1.msra.mxu0 0.0
    %242 = vmatprep.mubr.f32.mxu0 0.0
    %243 = vmatmul.mubr.f32.gmra.mrb[0].mxu0 %v152
    %v244 = vpop.f32.mrb[0].mxu0
    %v245 = vadd.f32 %v176, %v244
    %v246 = vpop.f32.mrb[0].mxu0
    %247 = vdwg.mxu0
    %248 = vst [vmem:[#allocation8] sm:$0xff] %v245
    // Predicated region
    $region34: #{tpu_custom_call.1} parent=1 // pred_check
      _
    $region35: #{tpu_custom_call.1} parent=1 // pred_check_branch
      %250 = sbr.rel (0) target = $region37
    $region36: #{tpu_custom_call.1} parent=1 // pred_region
      %s252 = ssub.s32 128, 128
      %253 = vsyncadd [#allocation4], %s252
      %s255 = sshll.u32 [#allocation8], 4
      %s256 = int_to_ptr.vmem [resolvable:$true] %s255
      %258 = dma.vmem_to_hbm [thread:$0]  %s256, 128, %s5, [#allocation4]
    $region37: #{tpu_custom_call.1} parent=1 // pred_fallthru
      _
    // Predicated region
    $region38: #{tpu_custom_call.1} parent=1 // pred_check
      _
    $region39: #{tpu_custom_call.1} parent=1 // pred_check_branch
      %260 = sbr.rel (0) target = $region41
    $region40: #{tpu_custom_call.1} parent=1 // pred_region
      %261 = dma.done [#allocation4], 128
    $region41: #{tpu_custom_call.1} parent=1 // pred_fallthru
      _
    %262 = vsyncpa [#allocation3], 1
    %263 = vsyncpa [#allocation6], 1
    %264 = vsyncpa [#allocation4], 1

</llo_original>
